<compile_context>
chip_gen: v7x
topology: tpu7x:2x2x1
jax: 0.10.0
libtpu: 0.0.40
codegen_flags: <defaults>
</compile_context>

<pallas_src>
import functools

import jax
import jax.numpy as jnp
from jax.experimental import pallas as pl
from jax.experimental.pallas import tpu as pltpu

_VMEM_LIMIT = 48 * 1024 * 1024   # fits v7x (64 MiB physical), leaves headroom on v5e/v6e
_LANE = 128


def _round_up(n, m):
    return ((n + m - 1) // m) * m


# ----------------------------------------------------------------------------
# 3-D tiled matmul kernel (bf16 A/B, f32 accumulate, fused bias + activation)
# Used only for the stride-2 im2col convs of the discriminator.
# ----------------------------------------------------------------------------
def _mm_kernel(act, alpha, a_ref, b_ref, bias_ref, o_ref, acc_ref):
    @pl.when(pl.program_id(2) == 0)
    def _():
        acc_ref[...] = jnp.zeros_like(acc_ref)

    acc_ref[...] += jnp.dot(a_ref[...], b_ref[...],
                            preferred_element_type=jnp.float32)

    @pl.when(pl.program_id(2) == pl.num_programs(2) - 1)
    def _():
        y = acc_ref[...] + bias_ref[...]
        if act == "relu":
            y = jnp.maximum(y, 0.0)
        elif act == "leaky":
            y = jnp.where(y >= 0.0, y, alpha * y)
        o_ref[...] = y


def pallas_matmul_bias_act(a, b, bias, act="none", alpha=0.2):
    """a:(M,K) @ b:(K,N) + bias:(1,N), K % 128 == 0, bf16 operands, f32 out."""
    M, K = a.shape
    K2, N = b.shape
    assert K == K2 and K % 128 == 0

    tm = 256 if M >= 256 else _round_up(M, 8)
    Mp = _round_up(M, tm)
    if Mp != M:
        a = jnp.pad(a, ((0, Mp - M), (0, 0)))
    tn = N if N <= 256 else 256
    assert N % tn == 0
    if K % 512 == 0:
        tk = 512
    elif K % 256 == 0:
        tk = 256
    else:
        tk = 128

    grid = (Mp // tm, N // tn, K // tk)
    kernel = functools.partial(_mm_kernel, act, alpha)
    out = pl.pallas_call(
        kernel,
        out_shape=jax.ShapeDtypeStruct((Mp, N), jnp.float32),
        grid_spec=pltpu.PrefetchScalarGridSpec(
            num_scalar_prefetch=0,
            grid=grid,
            in_specs=[
                pl.BlockSpec((tm, tk), lambda i, j, k: (i, k)),
                pl.BlockSpec((tk, tn), lambda i, j, k: (k, j)),
                pl.BlockSpec((1, tn), lambda i, j, k: (0, j)),
            ],
            out_specs=pl.BlockSpec((tm, tn), lambda i, j, k: (i, j)),
            scratch_shapes=[pltpu.VMEM((tm, tn), jnp.float32)],
        ),
        compiler_params=pltpu.CompilerParams(
            dimension_semantics=("parallel", "parallel", "arbitrary"),
            vmem_limit_bytes=_VMEM_LIMIT,
        ),
    )(a.astype(jnp.bfloat16), b.astype(jnp.bfloat16), bias.astype(jnp.float32))
    return out[:M]


# ----------------------------------------------------------------------------
# Direct (no-im2col) stride-1 conv kernel.
# Grid = (batch, Cout tiles).  One padded NHWC image is resident in VMEM; the
# kh*kw shifted windows are sliced in-kernel and accumulated on the MXU.
# ----------------------------------------------------------------------------
def _direct_conv_kernel(kh, kw, C, Ho, Wo, act, alpha,
                        x_ref, w_ref, bias_ref, o_ref):
    tn = o_ref.shape[-1]
    acc = jnp.zeros((Ho * Wo, tn), jnp.float32)
    for ki in range(kh):
        for kj in range(kw):
            a = x_ref[ki:ki + Ho, kj:kj + Wo, :].reshape(Ho * Wo, C)
            wt = w_ref[(ki * kw + kj) * C:(ki * kw + kj + 1) * C, :]
            acc = acc + jnp.dot(a, wt, preferred_element_type=jnp.float32)
    y = acc + bias_ref[...]
    if act == "relu":
        y = jnp.maximum(y, 0.0)
    elif act == "leaky":
        y = jnp.where(y >= 0.0, y, alpha * y)
    o_ref[...] = y


def conv2d_direct(x, w, b=None, *, pad=1, act="none", alpha=0.2):
    """Stride-1 conv, NHWC in/out. x:(B,H,W,C), w:(Cout,Cin,kh,kw)."""
    B, H, W, C = x.shape
    Cout, Cin, kh, kw = w.shape
    assert Cin == C
    Hp, Wp = H + 2 * pad, W + 2 * pad
    Ho, Wo = Hp - kh + 1, Wp - kw + 1

    xp = jnp.pad(x, ((0, 0), (pad, pad), (pad, pad), (0, 0))).astype(jnp.bfloat16)
    wmat = w.transpose(2, 3, 1, 0).reshape(kh * kw * C, Cout).astype(jnp.bfloat16)
    bias = (b if b is not None else jnp.zeros((Cout,), jnp.float32))
    bias = bias.reshape(1, Cout).astype(jnp.float32)

    tn = Cout if Cout <= 256 else 256
    assert Cout % tn == 0
    grid = (B, Cout // tn)
    kernel = functools.partial(_direct_conv_kernel, kh, kw, C, Ho, Wo, act, alpha)
    out = pl.pallas_call(
        kernel,
        out_shape=jax.ShapeDtypeStruct((B, Ho * Wo, Cout), jnp.float32),
        grid_spec=pltpu.PrefetchScalarGridSpec(
            num_scalar_prefetch=0,
            grid=grid,
            in_specs=[
                pl.BlockSpec((None, Hp, Wp, C), lambda bb, n: (bb, 0, 0, 0)),
                pl.BlockSpec((kh * kw * C, tn), lambda bb, n: (0, n)),
                pl.BlockSpec((1, tn), lambda bb, n: (0, n)),
            ],
            out_specs=pl.BlockSpec((None, Ho * Wo, tn), lambda bb, n: (bb, 0, n)),
        ),
        compiler_params=pltpu.CompilerParams(
            dimension_semantics=("parallel", "parallel"),
            vmem_limit_bytes=_VMEM_LIMIT,
        ),
    )(xp, wmat, bias)
    return out.reshape(B, Ho, Wo, Cout)
    # TODO(synk): at very large resolutions the per-image padded tile should be
    # row-tiled with a halo BlockSpec instead of being fully VMEM-resident.


# ----------------------------------------------------------------------------
# Strided (stride=2) conv via NHWC im2col + tiled Pallas matmul.
# ----------------------------------------------------------------------------
def conv2d_im2col(x, w, b=None, *, stride=2, pad=1, act="none", alpha=0.2):
    B, H, W, C = x.shape
    Cout, Cin, kh, kw = w.shape
    assert Cin == C
    xp = jnp.pad(x, ((0, 0), (pad, pad), (pad, pad), (0, 0))).astype(jnp.bfloat16)
    Ho = (H + 2 * pad - kh) // stride + 1
    Wo = (W + 2 * pad - kw) // stride + 1
    cols = []
    for ki in range(kh):
        for kj in range(kw):
            cols.append(xp[:, ki:ki + Ho * stride:stride,
                           kj:kj + Wo * stride:stride, :])       # (B,Ho,Wo,C)
    col = jnp.stack(cols, axis=3).reshape(B * Ho * Wo, kh * kw * C)  # bf16
    K = kh * kw * C
    Kp = _round_up(K, _LANE)                   # lane-dense contraction dim
    wmat = w.transpose(2, 3, 1, 0).reshape(K, Cout).astype(jnp.bfloat16)
    if Kp != K:
        col = jnp.pad(col, ((0, 0), (0, Kp - K)))
        wmat = jnp.pad(wmat, ((0, Kp - K), (0, 0)))
    bias = (b if b is not None else jnp.zeros((Cout,), jnp.float32)).reshape(1, Cout)
    out = pallas_matmul_bias_act(col, wmat, bias, act=act, alpha=alpha)
    return out.reshape(B, Ho, Wo, Cout)


def conv2d_cout1(x, w, b, pad=1):
    """Cout=1 conv kept off the MXU (N=1 would be <1% utilisation + lane-1 stores):
    hand-rolled tap accumulation with jnp reductions."""
    B, H, W, C = x.shape
    Cout, Cin, kh, kw = w.shape
    assert Cout == 1 and Cin == C
    xp = jnp.pad(x, ((0, 0), (pad, pad), (pad, pad), (0, 0)))
    Ho = H + 2 * pad - kh + 1
    Wo = W + 2 * pad - kw + 1
    out = jnp.zeros((B, Ho, Wo), jnp.float32)
    for ki in range(kh):
        for kj in range(kw):
            patch = xp[:, ki:ki + Ho, kj:kj + Wo, :]
            out = out + jnp.einsum('bhwc,c->bhw', patch, w[0, :, ki, kj])
    return out[..., None] + b.reshape(1, 1, 1, 1)


# ----------------------------------------------------------------------------
# Tiled scalar reductions (resident (1,1) accumulator over an "arbitrary" grid)
# ----------------------------------------------------------------------------
def _reduce_sum_kernel(elem_fn, n_in, *refs):
    o_ref = refs[n_in]

    @pl.when(pl.program_id(0) == 0)
    def _():
        o_ref[...] = jnp.zeros_like(o_ref)

    vals = [refs[i][...] for i in range(n_in)]
    o_ref[...] += jnp.sum(elem_fn(*vals))


def _prep_reduce_operand(x, pad_value, rows_final):
    flat = x.reshape(-1).astype(jnp.float32)
    total = rows_final * _LANE
    flat = jnp.pad(flat, (0, total - flat.size), constant_values=pad_value)
    return flat.reshape(rows_final, _LANE)


def pallas_tiled_mean(elem_fn, arrays, pad_values):
    n = int(arrays[0].size)
    rows = -(-n // _LANE)
    rb = 256 if rows >= 256 else _round_up(rows, 8)
    rows_final = _round_up(rows, rb)
    ops = [_prep_reduce_operand(a, pv, rows_final) for a, pv in zip(arrays, pad_values)]
    kernel = functools.partial(_reduce_sum_kernel, elem_fn, len(arrays))
    out = pl.pallas_call(
        kernel,
        out_shape=jax.ShapeDtypeStruct((1, 1), jnp.float32),
        grid=(rows_final // rb,),
        in_specs=[pl.BlockSpec((rb, _LANE), lambda i: (i, 0)) for _ in arrays],
        out_specs=pl.BlockSpec((1, 1), lambda i: (0, 0)),
        compiler_params=pltpu.CompilerParams(dimension_semantics=("arbitrary",)),
    )(*ops)
    return out[0, 0] / n


def l1_mean(a, b):
    return pallas_tiled_mean(lambda x, y: jnp.abs(x - y), [a, b], [0.0, 0.0])


def pallas_mean(x):
    return pallas_tiled_mean(lambda v: v, [x], [0.0])


def hinge_d_loss(logits_real, logits_fake):
    # pad real with +1 and fake with -1 so padded elements contribute 0
    fn = lambda r, f: 0.5 * (jnp.maximum(1.0 - r, 0.0) + jnp.maximum(1.0 + f, 0.0))
    return pallas_tiled_mean(fn, [logits_real, logits_fake], [1.0, -1.0])


# ----------------------------------------------------------------------------
# Masked softmax cross-entropy (tiled over batch)
# ----------------------------------------------------------------------------
def _masked_ce_kernel(pred_ref, label_ref, valid_ref, o_ref):
    @pl.when(pl.program_id(0) == 0)
    def _():
        o_ref[...] = jnp.zeros_like(o_ref)

    logits = pred_ref[...]            # (T, V) f32
    labels = label_ref[...]           # (T, 1) i32
    valid = valid_ref[...]            # (1, 1) i32
    T, V = logits.shape
    m = jnp.max(logits, axis=-1, keepdims=True)
    lse = m + jnp.log(jnp.sum(jnp.exp(logits - m), axis=-1, keepdims=True))   # (T,1)
    iota_v = jax.lax.broadcasted_iota(jnp.int32, (T, V), 1)
    onehot = (iota_v == labels).astype(jnp.float32)
    picked = jnp.sum(logits * onehot, axis=-1, keepdims=True)                 # (T,1)
    unweighted = lse - picked
    iota_t = jax.lax.broadcasted_iota(jnp.int32, (T, 1), 0)
    weights = (iota_t < valid).astype(jnp.float32)
    o_ref[...] += jnp.sum(unweighted * weights) / T       # .mean(dim=1)


def masked_softmax_ce_loss(pred, label, valid_lens):
    pred = pred.astype(jnp.float32)
    B, T, V = pred.shape
    label3 = label.reshape(B, T, 1).astype(jnp.int32)
    valid3 = valid_lens.reshape(B, 1, 1).astype(jnp.int32)
    out = pl.pallas_call(
        _masked_ce_kernel,
        out_shape=jax.ShapeDtypeStruct((1, 1), jnp.float32),
        grid=(B,),
        in_specs=[pl.BlockSpec((None, T, V), lambda b: (b, 0, 0)),
                  pl.BlockSpec((None, T, 1), lambda b: (b, 0, 0)),
                  pl.BlockSpec((None, 1, 1), lambda b: (b, 0, 0))],
        out_specs=pl.BlockSpec((1, 1), lambda b: (0, 0)),
        compiler_params=pltpu.CompilerParams(dimension_semantics=("arbitrary",)),
    )(pred, label3, valid3)
    return out[0, 0] / B


# ----------------------------------------------------------------------------
# Small NHWC helpers (cheap / mem-bound, stay in jnp)
# ----------------------------------------------------------------------------
def leaky_relu(x, alpha=0.2):
    return jnp.where(x >= 0.0, x, alpha * x)


def batchnorm_train(x, gamma, beta, eps=1e-5):
    # nn.BatchNorm2d training mode (batch statistics).  TODO(synk): folding BN
    # into the conv epilogue needs the conv output's batch stats first, so a
    # second (fused scale/shift + leaky) pass is unavoidable in training mode.
    mu = jnp.mean(x, axis=(0, 1, 2), keepdims=True)
    var = jnp.var(x, axis=(0, 1, 2), keepdims=True)
    return gamma.reshape(1, 1, 1, -1) * (x - mu) * jax.lax.rsqrt(var + eps) \
        + beta.reshape(1, 1, 1, -1)


def maxpool2x2(x):
    B, H, W, C = x.shape
    return x.reshape(B, H // 2, 2, W // 2, 2, C).max(axis=(2, 4))


# ----------------------------------------------------------------------------
# NLayerDiscriminator (PatchGAN, n_layers=3, BatchNorm, weights_init), NHWC
# ----------------------------------------------------------------------------
def init_discriminator_params(key, input_nc=3, ndf=64, n_layers=3):
    ks = list(jax.random.split(key, 16))
    p = {}

    def conv_w(k, cout, cin):
        return 0.02 * jax.random.normal(k, (cout, cin, 4, 4), jnp.float32)

    def bn(k, c):
        g = 1.0 + 0.02 * jax.random.normal(k, (c,), jnp.float32)
        return g, jnp.zeros((c,), jnp.float32)

    chans = [input_nc, ndf]
    for n in range(1, n_layers):
        chans.append(ndf * min(2 ** n, 8))
    chans.append(ndf * min(2 ** n_layers, 8))   # [3, 64, 128, 256, 512]
    p["c1_w"] = conv_w(ks[0], chans[1], chans[0])
    p["c1_b"] = jnp.zeros((chans[1],), jnp.float32)
    p["c2_w"] = conv_w(ks[1], chans[2], chans[1])
    p["bn2_g"], p["bn2_b"] = bn(ks[2], chans[2])
    p["c3_w"] = conv_w(ks[3], chans[3], chans[2])
    p["bn3_g"], p["bn3_b"] = bn(ks[4], chans[3])
    p["c4_w"] = conv_w(ks[5], chans[4], chans[3])
    p["bn4_g"], p["bn4_b"] = bn(ks[6], chans[4])
    p["c5_w"] = conv_w(ks[7], 1, chans[4])
    p["c5_b"] = jnp.zeros((1,), jnp.float32)
    return p


def discriminator_forward(x, p):
    """x: NHWC.  Returns patch logits (B, h, w, 1)."""
    x = conv2d_im2col(x, p["c1_w"], p["c1_b"], stride=2, pad=1, act="leaky")
    x = conv2d_im2col(x, p["c2_w"], None, stride=2, pad=1, act="none")
    x = leaky_relu(batchnorm_train(x, p["bn2_g"], p["bn2_b"]))
    x = conv2d_im2col(x, p["c3_w"], None, stride=2, pad=1, act="none")
    x = leaky_relu(batchnorm_train(x, p["bn3_g"], p["bn3_b"]))
    x = conv2d_direct(x, p["c4_w"], None, pad=1, act="none")      # stride 1, 4x4
    x = leaky_relu(batchnorm_train(x, p["bn4_g"], p["bn4_b"]))
    x = conv2d_cout1(x, p["c5_w"], p["c5_b"], pad=1)
    return x


# ----------------------------------------------------------------------------
# LPIPS (VGG16 trunk + 1x1 lin heads), NHWC
# TODO(synk): real LPIPS loads pretrained VGG16 + trained lin weights from a
# checkpoint; here the same architecture runs with deterministic He-init weights.
# ----------------------------------------------------------------------------
_VGG_BLOCKS = [(3, 64, 64), (64, 128, 128), (128, 256, 256, 256),
               (256, 512, 512, 512), (512, 512, 512, 512)]
_LPIPS_CHNS = [64, 128, 256, 512, 512]


def init_lpips_params(key):
    convs = []
    k = key
    for block in _VGG_BLOCKS:
        for cin, cout in zip(block[:-1], block[1:]):
            k, kw = jax.random.split(k)
            std = (2.0 / (cin * 9)) ** 0.5
            convs.append((std * jax.random.normal(kw, (cout, cin, 3, 3), jnp.float32),
                          jnp.zeros((cout,), jnp.float32)))
    lins = []
    for c in _LPIPS_CHNS:
        k, kl = jax.random.split(k)
        lins.append(0.1 * jax.random.normal(kl, (1, c, 1, 1), jnp.float32))
    return {"convs": convs, "lins": lins}


def _vgg_features(x, convs):
    feats = []
    idx = 0
    for bi, block in enumerate(_VGG_BLOCKS):
        if bi > 0:
            x = maxpool2x2(x)
        for _ in range(len(block) - 1):
            w, b = convs[idx]
            idx += 1
            x = conv2d_direct(x, w, b, pad=1, act="relu")   # fused ReLU in Pallas
        feats.append(x)
    return feats   # relu1_2, relu2_2, relu3_3, relu4_3, relu5_3


def _lpips_level_score(f0, f1, lin_w, eps=1e-10):
    # channel-unit-normalize, squared diff, then the Cout=1 "lin" conv and the
    # spatial average fused into a single weighted reduction (no MXU N=1 matmul).
    n0 = f0 / (jnp.sqrt(jnp.sum(f0 * f0, axis=-1, keepdims=True)) + eps)
    n1 = f1 / (jnp.sqrt(jnp.sum(f1 * f1, axis=-1, keepdims=True)) + eps)
    d = (n0 - n1) ** 2
    B, H, W, C = d.shape
    return jnp.einsum('bhwc,c->b', d, lin_w.reshape(-1)) / (H * W)


def lpips_forward(in0, in1, params):
    """in0,in1: NHWC. Returns per-image LPIPS score (B,). Both VGG passes batched."""
    shift = jnp.array([-0.030, -0.088, -0.188], jnp.float32).reshape(1, 1, 1, 3)
    scale = jnp.array([0.458, 0.448, 0.450], jnp.float32).reshape(1, 1, 1, 3)
    B = in0.shape[0]
    x = jnp.concatenate([(in0 - shift) / scale, (in1 - shift) / scale], axis=0)
    feats = _vgg_features(x, params["convs"])
    val = jnp.zeros((B,), jnp.float32)
    for kk in range(5):
        f = feats[kk]
        val = val + _lpips_level_score(f[:B], f[B:], params["lins"][kk])
    return val


# ----------------------------------------------------------------------------
# VQLPIPSWithDiscriminator forward
# ----------------------------------------------------------------------------
def adopt_weight(weight, global_step, threshold=0, value=0.0):
    return value if global_step < threshold else weight


def vqlpips_forward(params, inputs, text_input, i2t_rec, t2i_rec, codebook_loss,
                    text_q_loss, valid_lens, c_loss, optimizer_idx, global_step,
                    last_layer=None, cond=None, split="train",
                    disc_start=0, codebook_weight=1.0, perceptual_weight=1.0,
                    disc_factor=1.0, disc_weight=1.0):
    assert cond is None  # disc_conditional=False

    # single layout conversion at the model boundary (everything below is NHWC)
    inputs_nhwc = jnp.transpose(inputs, (0, 2, 3, 1))
    t2i_nhwc = jnp.transpose(t2i_rec, (0, 2, 3, 1))

    if optimizer_idx == 0:
        abs_mean = l1_mean(inputs, t2i_rec)                         # mean |x - x_rec|
        per_image_p = lpips_forward(inputs_nhwc, t2i_nhwc, params["lpips"])   # (B,)
        t2i_p_loss_mean = jnp.mean(per_image_p)
        # mean(|x - xrec| + w_p * p_loss) == mean(|x - xrec|) + w_p * mean(p_loss)
        t2i_nll_loss = abs_mean + perceptual_weight * t2i_p_loss_mean

        i2t_rec_loss = masked_softmax_ce_loss(i2t_rec, text_input, valid_lens)

        t2i_logits_fake = discriminator_forward(t2i_nhwc, params["disc"])
        t2i_g_loss = -pallas_mean(t2i_logits_fake)

        # TODO(synk): calculate_adaptive_weight needs autograd through the external
        # decoder's last layer; with detached synthetic inputs the PyTorch code hits
        # the RuntimeError branch and uses d_weight = 0.0, reproduced here.
        d_weight = jnp.float32(0.0)
        df = adopt_weight(disc_factor, global_step, threshold=disc_start)

        loss = (t2i_nll_loss
                + d_weight * df * t2i_g_loss
                + i2t_rec_loss
                + codebook_weight * jnp.mean(codebook_loss)
                + jnp.mean(text_q_loss)
                + c_loss)
        log = {
            f"{split}/total_loss": loss,
            f"{split}/image_quant_loss": jnp.mean(codebook_loss),
            f"{split}/t2i_nll_loss": t2i_nll_loss,
            f"{split}/t2i_rec_loss": abs_mean,
            f"{split}/t2i_p_loss": t2i_p_loss_mean,
            f"{split}/d_weight": d_weight,
            f"{split}/disc_factor": jnp.float32(df),
            f"{split}/t2i_g_loss": t2i_g_loss,
            f"{split}/text_quant_loss": jnp.mean(text_q_loss),
            f"{split}/i2t_rec_loss": i2t_rec_loss,
            f"{split}/constrain_loss": c_loss,
        }
        return loss, log

    if optimizer_idx == 1:
        B = inputs.shape[0]
        # share one discriminator pass for real+fake (halves weight DMA traffic)
        both = jnp.concatenate([inputs_nhwc, t2i_nhwc], axis=0)
        logits = discriminator_forward(both, params["disc"])
        logits_real, t2i_logits_fake = logits[:B], logits[B:]
        df = adopt_weight(disc_factor, global_step, threshold=disc_start)
        t2i_d_loss = df * hinge_d_loss(logits_real, t2i_logits_fake)
        log = {
            f"{split}/disc_t2i_loss": t2i_d_loss,
            f"{split}/logits_real": jnp.mean(logits_real),
            f"{split}/t2i_logits_fake": jnp.mean(t2i_logits_fake),
        }
        return t2i_d_loss, log


# ----------------------------------------------------------------------------
# Demo
# ----------------------------------------------------------------------------
if __name__ == "__main__":
    B, C, H, W = 2, 3, 32, 32     # image (NCHW API, NHWC internally)
    T, V = 8, 32                  # text seq len, vocab

    key = jax.random.PRNGKey(0)
    k_in, k_rec, k_txt, k_lbl, k_cb, k_tq = jax.random.split(key, 6)

    inputs = jax.random.normal(k_in, (B, C, H, W), jnp.float32)
    t2i_rec = jax.random.normal(k_rec, (B, C, H, W), jnp.float32)
    i2t_rec = jax.random.normal(k_txt, (B, T, V), jnp.float32)
    text_input = jax.random.randint(k_lbl, (B, T), 0, V, jnp.int32)
    valid_lens = jnp.array([5, 8], jnp.int32)
    codebook_loss = 0.1 * jnp.abs(jax.random.normal(k_cb, (), jnp.float32))
    text_q_loss = 0.1 * jnp.abs(jax.random.normal(k_tq, (), jnp.float32))
    c_loss = jnp.float32(0.05)

    pkey = jax.random.PRNGKey(42)
    k_disc, k_lpips = jax.random.split(pkey)
    params = {
        "disc": init_discriminator_params(k_disc, input_nc=3, ndf=64, n_layers=3),
        "lpips": init_lpips_params(k_lpips),
    }

    # generator branch (optimizer_idx = 0)
    g_loss, g_log = vqlpips_forward(params, inputs, text_input, i2t_rec, t2i_rec,
                                    codebook_loss, text_q_loss, valid_lens, c_loss,
                                    optimizer_idx=0, global_step=1)
    # discriminator branch (optimizer_idx = 1)
    d_loss, d_log = vqlpips_forward(params, inputs, text_input, i2t_rec, t2i_rec,
                                    codebook_loss, text_q_loss, valid_lens, c_loss,
                                    optimizer_idx=1, global_step=1)

    jax.block_until_ready((g_loss, g_log, d_loss, d_log))
    assert jnp.isfinite(g_loss) and jnp.isfinite(d_loss)
    print("KERNEL_OK")
</pallas_src>

<mosaic_0001>
module attributes {stable_mosaic.version = 11 : i64} {
  func.func @_reduce_sum_kernel(%arg0: i32, %arg1: memref<48x128xf32, #tpu.memory_space<vmem>>, %arg2: memref<48x128xf32, #tpu.memory_space<vmem>>, %arg3: memref<1x1xf32, #tpu.memory_space<vmem>>) attributes {dimension_semantics = [#tpu.dimension_semantics<arbitrary>], iteration_bounds = array<i64: 1>, scalar_prefetch = 0 : i64, scratch_operands = 0 : i64, tpu.core_type = #tpu.core_type<tc>, window_params = [{transform_indices = @transform_0, window_bounds = array<i64: 48, 128>}, {transform_indices = @transform_1, window_bounds = array<i64: 48, 128>}, {pipeline_mode = #tpu.pipeline_mode<synchronous>, transform_indices = @transform_2, window_bounds = array<i64: 1, 1>}]} {
    %c0_i32 = arith.constant 0 : i32
    %0 = arith.cmpi eq, %arg0, %c0_i32 : i32
    %1 = arith.extui %0 : i1 to i32
    %c0_i32_0 = arith.constant 0 : i32
    %2 = arith.cmpi ne, %1, %c0_i32_0 : i32
    scf.if %2 {
      %cst_8 = arith.constant 0.000000e+00 : f32
      %15 = vector.broadcast %cst_8 : f32 to vector<1x1xf32>
      %c0_9 = arith.constant 0 : index
      %c0_10 = arith.constant 0 : index
      %16 = vector.load %arg3[%c0_9, %c0_10] : memref<1x1xf32, #tpu.memory_space<vmem>>, vector<1x1xf32>
      tpu.vector_store %arg3[%c0_9, %c0_10], %15 {strides = array<i32>} : memref<1x1xf32, #tpu.memory_space<vmem>>, vector<1x1xf32>,
    } else {
    }
    %c0 = arith.constant 0 : index
    %c0_1 = arith.constant 0 : index
    %3 = vector.load %arg1[%c0, %c0_1] : memref<48x128xf32, #tpu.memory_space<vmem>>, vector<48x128xf32>
    %c0_2 = arith.constant 0 : index
    %c0_3 = arith.constant 0 : index
    %4 = vector.load %arg2[%c0_2, %c0_3] : memref<48x128xf32, #tpu.memory_space<vmem>>, vector<48x128xf32>
    %c0_4 = arith.constant 0 : index
    %c0_5 = arith.constant 0 : index
    %5 = vector.load %arg3[%c0_4, %c0_5] : memref<1x1xf32, #tpu.memory_space<vmem>>, vector<1x1xf32>
    %6 = arith.subf %3, %4 : vector<48x128xf32>
    %7 = math.absf %6 : vector<48x128xf32>
    %8 = vector.shape_cast %7 : vector<48x128xf32> to vector<1x48x128xf32>
    %cst = arith.constant dense<0.000000e+00> : vector<1xf32>
    %9 = vector.multi_reduction <add>, %8, %cst [1, 2] : vector<1x48x128xf32> to vector<1xf32>
    %10 = vector.shape_cast %9 : vector<1xf32> to vector<1x1x1xf32>
    %11 = vector.extract %10[0, 0, 0] : f32 from vector<1x1x1xf32>
    %12 = vector.broadcast %11 : f32 to vector<1x1xf32>
    %13 = arith.addf %5, %12 : vector<1x1xf32>
    %c0_6 = arith.constant 0 : index
    %c0_7 = arith.constant 0 : index
    %14 = vector.load %arg3[%c0_6, %c0_7] : memref<1x1xf32, #tpu.memory_space<vmem>>, vector<1x1xf32>
    tpu.vector_store %arg3[%c0_6, %c0_7], %13 {strides = array<i32>} : memref<1x1xf32, #tpu.memory_space<vmem>>, vector<1x1xf32>,
    return
  }
  func.func @transform_0(%arg0: i32) -> (i32, i32) {
    %c0_i32 = arith.constant 0 : i32
    %c0_i32_0 = arith.constant 0 : i32
    return %arg0, %c0_i32 : i32, i32
  }
  func.func @transform_1(%arg0: i32) -> (i32, i32) {
    %c0_i32 = arith.constant 0 : i32
    %c0_i32_0 = arith.constant 0 : i32
    return %arg0, %c0_i32 : i32, i32
  }
  func.func @transform_2(%arg0: i32) -> (i32, i32) {
    %c0_i32 = arith.constant 0 : i32
    %c0_i32_0 = arith.constant 0 : i32
    %c0_i32_1 = arith.constant 0 : i32
    return %c0_i32, %c0_i32_0 : i32, i32
  }
}

</mosaic_0001>

<llo_original>
// kernel: tpu_custom_call.1
$region0: #{tpu_custom_call.1}
  #allocation0 [shape = 'u32[]', space=smem, size = 0x4, offset = 0x4, fixed_abs, tag = 'smem constant byte address 0x4 - core index']
  #allocation1 [shape = 'u32[144,128]{1,0:T(1,128)}', space=vmem, size = 0x12000, scoped, tag = 'internal scratch']
  %s0 = inlined_call_operand.hbm [shape: f32[48,128], index: 0, kind: input, shape index: {}]
  %s1 = inlined_call_operand.hbm [shape: f32[48,128], index: 1, kind: input, shape index: {}]
  %s2 = inlined_call_operand.hbm [shape: f32[1,1], index: 2, kind: output, shape index: {}]
  %s3 = sld [smem:[#allocation0]]
  $region30: #{tpu_custom_call.1} parent=0
    _
  %s5 = ssub.s32 1, %s3
  %s6 = scalar_select 0, %s5, %s3
  $region1: #{tpu_custom_call.1} parent=0
    #allocation2 [shape = 'u8[24576]{0}', space=vmem, size = 0x6000, scoped, tag = 'input window, operand 0, single buffered']
    #allocation3 [shape = 's32[1]{0}', space=sflag, size = 0x4, scoped, tag = 'scoped memory for tpu_custom_call.1']
    #allocation4 [shape = 's32[1]{0}', space=sflag, size = 0x4, scoped, tag = 'scoped memory for tpu_custom_call.1']
    #allocation5 [shape = 'u8[24576]{0}', space=vmem, size = 0x6000, scoped, tag = 'input window, operand 1, single buffered']
    #allocation6 [shape = 's32[1]{0}', space=sflag, size = 0x4, scoped, tag = 'scoped memory for tpu_custom_call.1']
    #allocation7 [shape = 'u8[512]{0}', space=vmem, size = 0x400, scoped, tag = 'output window, operand 0, single buffered']
    %7 = vsyncpa [#allocation3], 0
    %8 = vsyncpa [#allocation6], 0
    %9 = vsyncpa [#allocation4], 0
    // Predicated region
    $region2: #{tpu_custom_call.1} parent=1 // pred_check
      _
    $region3: #{tpu_custom_call.1} parent=1 // pred_check_branch
      %11 = sbr.rel (0) target = $region5
    $region4: #{tpu_custom_call.1} parent=1 // pred_region
      %s13 = ssub.s32 768, 768
      %14 = vsyncadd [#allocation3], %s13
      %s15 = sshll.u32 [#allocation2], 4
      %s16 = int_to_ptr.vmem [resolvable:$true] %s15
      %21 = dma.hbm_to_vmem [thread:$0]  %s0, 768, %s16, [#allocation3], 128, 128, 8
    $region5: #{tpu_custom_call.1} parent=1 // pred_fallthru
      _
    // Predicated region
    $region6: #{tpu_custom_call.1} parent=1 // pred_check
      _
    $region7: #{tpu_custom_call.1} parent=1 // pred_check_branch
      %23 = sbr.rel (0) target = $region9
    $region8: #{tpu_custom_call.1} parent=1 // pred_region
      %s25 = ssub.s32 768, 768
      %26 = vsyncadd [#allocation6], %s25
      %s27 = sshll.u32 [#allocation5], 4
      %s28 = int_to_ptr.vmem [resolvable:$true] %s27
      %33 = dma.hbm_to_vmem [thread:$0]  %s1, 768, %s28, [#allocation6], 128, 128, 8
    $region9: #{tpu_custom_call.1} parent=1 // pred_fallthru
      _
    // Predicated region
    $region10: #{tpu_custom_call.1} parent=1 // pred_check
      _
    $region11: #{tpu_custom_call.1} parent=1 // pred_check_branch
      %35 = sbr.rel (0) target = $region13
    $region12: #{tpu_custom_call.1} parent=1 // pred_region
      %36 = dma.done [#allocation3], 768
    $region13: #{tpu_custom_call.1} parent=1 // pred_fallthru
      _
    // Predicated region
    $region14: #{tpu_custom_call.1} parent=1 // pred_check
      _
    $region15: #{tpu_custom_call.1} parent=1 // pred_check_branch
      %38 = sbr.rel (0) target = $region17
    $region16: #{tpu_custom_call.1} parent=1 // pred_region
      %39 = dma.done [#allocation6], 768
    $region17: #{tpu_custom_call.1} parent=1 // pred_fallthru
      _
    %p40 = scmp.eq.s32.totalorder 0, 0
    // Predicated region
    $region18: #{tpu_custom_call.1} parent=1 // pred_check
      %p41 = pneg %p40
    $region19: #{tpu_custom_call.1} parent=1 // pred_check_branch
      %43 = sbr.rel (%p41) target = $region21
    $region20: #{tpu_custom_call.1} parent=1 // pred_region
      %vm44 = vcmask 0
      %45 = vst.msk [vmem:[#allocation7] sm:$0x1] %vm44, 0.0
    $region21: #{tpu_custom_call.1} parent=1 // pred_fallthru
      _
    %v46 = vld [vmem:[#allocation2] sm:$0xff]
    %v47 = vld [vmem:[#allocation2 + $0x8] sm:$0xff]
    %v48 = vld [vmem:[#allocation2 + $0x10] sm:$0xff]
    %v49 = vld [vmem:[#allocation2 + $0x18] sm:$0xff]
    %v50 = vld [vmem:[#allocation2 + $0x20] sm:$0xff]
    %v51 = vld [vmem:[#allocation2 + $0x28] sm:$0xff]
    %v52 = vld [vmem:[#allocation5] sm:$0xff]
    %v53 = vld [vmem:[#allocation5 + $0x8] sm:$0xff]
    %v54 = vld [vmem:[#allocation5 + $0x10] sm:$0xff]
    %v55 = vld [vmem:[#allocation5 + $0x18] sm:$0xff]
    %v56 = vld [vmem:[#allocation5 + $0x20] sm:$0xff]
    %v57 = vld [vmem:[#allocation5 + $0x28] sm:$0xff]
    %v58 = vld [vmem:[#allocation7] sm:$0x1]
    %v59 = vsub.f32 %v46, %v52
    %v60 = vsub.f32 %v47, %v53
    %v61 = vsub.f32 %v48, %v54
    %v62 = vsub.f32 %v49, %v55
    %v63 = vsub.f32 %v50, %v56
    %v64 = vsub.f32 %v51, %v57
    %v65 = vand.u32 2147483647, %v59
    %v66 = vand.u32 2147483647, %v60
    %v67 = vand.u32 2147483647, %v61
    %v68 = vand.u32 2147483647, %v62
    %v69 = vand.u32 2147483647, %v63
    %v70 = vand.u32 2147483647, %v64
    %v71 = vadd.f32 %v65, %v66
    %v72 = vadd.f32 %v71, %v67
    %v73 = vadd.f32 %v72, %v68
    %v74 = vadd.f32 %v73, %v69
    %v75 = vadd.f32 %v74, %v70
    %76 = vadd.xlane.f32.xlu0 %v75
    %v77 = vpop.xlane.xlu0 %76
    %v78 = vrot.slane %v77, 4
    %v79 = vadd.f32 %v77, %v78
    %v80 = vrot.slane %v79, 2
    %v81 = vadd.f32 %v79, %v80
    %v82 = vrot.slane %v81, 1
    %v83 = vadd.f32 %v81, %v82
    %s84 = vtos %v83
    %v85 = vstv %s84
    %v86 = vadd.f32 %v58, %v85
    %vm87 = vcmask 0
    %88 = vst.msk [vmem:[#allocation7] sm:$0x1] %vm87, %v86
    // Predicated region
    $region22: #{tpu_custom_call.1} parent=1 // pred_check
      _
    $region23: #{tpu_custom_call.1} parent=1 // pred_check_branch
      %90 = sbr.rel (0) target = $region25
    $region24: #{tpu_custom_call.1} parent=1 // pred_region
      %s92 = ssub.s32 16, 16
      %93 = vsyncadd [#allocation4], %s92
      %s95 = sshll.u32 [#allocation7], 4
      %s96 = int_to_ptr.vmem [resolvable:$true] %s95
      %98 = dma.vmem_to_hbm [thread:$0]  %s96, 16, %s2, [#allocation4]
    $region25: #{tpu_custom_call.1} parent=1 // pred_fallthru
      _
    // Predicated region
    $region26: #{tpu_custom_call.1} parent=1 // pred_check
      _
    $region27: #{tpu_custom_call.1} parent=1 // pred_check_branch
      %100 = sbr.rel (0) target = $region29
    $region28: #{tpu_custom_call.1} parent=1 // pred_region
      %101 = dma.done [#allocation4], 16
    $region29: #{tpu_custom_call.1} parent=1 // pred_fallthru
      _
    %102 = vsyncpa [#allocation3], 1
    %103 = vsyncpa [#allocation6], 1
    %104 = vsyncpa [#allocation4], 1

</llo_original>
